<compile_context>
chip_gen: v6e
topology: v6e:2x2x1
jax: 0.10.0
libtpu: 0.0.40
codegen_flags: <defaults>
</compile_context>

<pallas_src>
import functools

import jax
import jax.numpy as jnp
from jax.experimental import pallas as pl
from jax.experimental.pallas import tpu as pltpu


def _round_up(x, m):
    return ((x + m - 1) // m) * m


def actor_net_kernel(x_ref, w1_ref, b1_ref, w2_ref, b2_ref, out_ref, *, p_valid):
    # x: [TB, H], w1: [H, H/2], b1: [1, H/2], w2: [H/2, P_pad], b2: [1, P_pad]
    x = x_ref[...]

    # Layer 1: Linear + ReLU (MXU matmul, f32 accumulate).
    h = jnp.dot(x, w1_ref[...], preferred_element_type=jnp.float32) + b1_ref[...]
    h = jnp.maximum(h, 0.0)

    # Layer 2: Linear -> logits over the (lane-padded) program dimension.
    logits = jnp.dot(h, w2_ref[...], preferred_element_type=jnp.float32) + b2_ref[...]

    # Numerically stable softmax over the real `p_valid` lanes only:
    # padded lanes are forced to -inf so exp() contributes exactly 0 to the sum.
    lane = jax.lax.broadcasted_iota(jnp.int32, logits.shape, 1)
    masked = jnp.where(lane < p_valid, logits, -jnp.inf)
    m = jnp.max(masked, axis=-1, keepdims=True)
    e = jnp.exp(masked - m)
    denom = jnp.sum(e, axis=-1, keepdims=True)
    # EUP reciprocal instead of VALU divide (exact; approx=True would need a
    # looser tolerance in the self-test).
    out_ref[...] = (e * pl.reciprocal(denom, approx=False)).astype(out_ref.dtype)


def actor_net_forward(x, w1_t, b1, w2_t, b2, *, tb=128):
    """x: [B, H] f32; w1_t: [H, H//2]; b1: [1, H//2]; w2_t: [H//2, P]; b2: [1, P]."""
    B, H = x.shape
    H2 = w1_t.shape[1]
    P = w2_t.shape[1]

    # Sublane-pad the batch to a multiple of 8 and tile it; lane-pad the output
    # class dimension to a multiple of 128 so the final store is lane-dense.
    B_pad = _round_up(B, 8)
    tb = min(tb, B_pad)                 # tb stays a multiple of 8
    B_pad = _round_up(B_pad, tb)
    P_pad = _round_up(P, 128)

    x_p = x if B_pad == B else jnp.zeros((B_pad, H), x.dtype).at[:B].set(x)
    if P_pad == P:
        w2_p, b2_p = w2_t, b2
    else:
        w2_p = jnp.zeros((H2, P_pad), w2_t.dtype).at[:, :P].set(w2_t)
        b2_p = jnp.zeros((1, P_pad), b2.dtype).at[:, :P].set(b2)

    grid = (B_pad // tb,)
    kernel = functools.partial(actor_net_kernel, p_valid=P)

    out = pl.pallas_call(
        kernel,
        out_shape=jax.ShapeDtypeStruct((B_pad, P_pad), jnp.float32),
        grid_spec=pltpu.PrefetchScalarGridSpec(
            num_scalar_prefetch=0,
            grid=grid,
            in_specs=[
                pl.BlockSpec((tb, H), lambda i: (i, 0)),      # x tile (pipelined)
                pl.BlockSpec((H, H2), lambda i: (0, 0)),      # w1: VMEM-resident
                pl.BlockSpec((1, H2), lambda i: (0, 0)),      # b1: VMEM-resident
                pl.BlockSpec((H2, P_pad), lambda i: (0, 0)),  # w2: VMEM-resident
                pl.BlockSpec((1, P_pad), lambda i: (0, 0)),   # b2: VMEM-resident
            ],
            out_specs=pl.BlockSpec((tb, P_pad), lambda i: (i, 0)),
        ),
        compiler_params=pltpu.CompilerParams(
            # Batch tiles are independent -> shard across v7x's 2 TensorCores.
            dimension_semantics=("parallel",),
        ),
    )(x_p, w1_t, b1, w2_p, b2_p)

    # Slice off batch padding and the padded (zero-probability) class lanes.
    return out[:B, :P]


def init_actor_net_params(key, hidden_size, num_programs):
    """Deterministic init mirroring torch.nn.Linear default (uniform(-1/sqrt(fan_in), +))."""
    h2 = hidden_size // 2
    k1, k2, k3, k4 = jax.random.split(key, 4)
    bound1 = 1.0 / jnp.sqrt(hidden_size)
    bound2 = 1.0 / jnp.sqrt(h2)
    # stored pre-transposed: [in, out]
    w1_t = jax.random.uniform(k1, (hidden_size, h2), jnp.float32, -bound1, bound1)
    b1 = jax.random.uniform(k2, (1, h2), jnp.float32, -bound1, bound1)
    w2_t = jax.random.uniform(k3, (h2, num_programs), jnp.float32, -bound2, bound2)
    b2 = jax.random.uniform(k4, (1, num_programs), jnp.float32, -bound2, bound2)
    return w1_t, b1, w2_t, b2


if __name__ == "__main__":
    hidden_size = 32
    num_programs = 8
    batch = 2

    key = jax.random.PRNGKey(0)
    key_params, key_x = jax.random.split(key)

    w1_t, b1, w2_t, b2 = init_actor_net_params(key_params, hidden_size, num_programs)
    hidden_state = jax.random.normal(key_x, (batch, hidden_size), jnp.float32)

    out = actor_net_forward(hidden_state, w1_t, b1, w2_t, b2)
    out = jax.block_until_ready(out)

    # Reference check in plain JAX (same math as the PyTorch forward).
    h_ref = jnp.maximum(hidden_state @ w1_t + b1, 0.0)
    logits_ref = h_ref @ w2_t + b2
    ref = jax.nn.softmax(logits_ref, axis=-1)
    assert out.shape == (batch, num_programs)
    assert jnp.allclose(out, ref, atol=1e-5, rtol=1e-5)
    # softmax rows sum to 1 (padded lanes excluded from the normalization)
    assert jnp.allclose(jnp.sum(out, axis=-1), 1.0, atol=1e-5)

    print("KERNEL_OK")
</pallas_src>

<mosaic_0001>
module attributes {stable_mosaic.version = 11 : i64} {
  func.func @actor_net_kernel(%arg0: i32, %arg1: memref<8x32xf32, #tpu.memory_space<vmem>>, %arg2: memref<32x16xf32, #tpu.memory_space<vmem>>, %arg3: memref<1x16xf32, #tpu.memory_space<vmem>>, %arg4: memref<16x128xf32, #tpu.memory_space<vmem>>, %arg5: memref<1x128xf32, #tpu.memory_space<vmem>>, %arg6: memref<8x128xf32, #tpu.memory_space<vmem>>) attributes {dimension_semantics = [#tpu.dimension_semantics<parallel>], iteration_bounds = array<i64: 1>, scalar_prefetch = 0 : i64, scratch_operands = 0 : i64, tpu.core_type = #tpu.core_type<tc>, window_params = [{transform_indices = @transform_0, window_bounds = array<i64: 8, 32>}, {pipeline_mode = #tpu.pipeline_mode<synchronous>, transform_indices = @transform_1, window_bounds = array<i64: 32, 16>}, {pipeline_mode = #tpu.pipeline_mode<synchronous>, transform_indices = @transform_2, window_bounds = array<i64: 1, 16>}, {pipeline_mode = #tpu.pipeline_mode<synchronous>, transform_indices = @transform_3, window_bounds = array<i64: 16, 128>}, {pipeline_mode = #tpu.pipeline_mode<synchronous>, transform_indices = @transform_4, window_bounds = array<i64: 1, 128>}, {transform_indices = @transform_5, window_bounds = array<i64: 8, 128>}]} {
    %c0 = arith.constant 0 : index
    %c0_0 = arith.constant 0 : index
    %0 = vector.load %arg1[%c0, %c0_0] : memref<8x32xf32, #tpu.memory_space<vmem>>, vector<8x32xf32>
    %c0_1 = arith.constant 0 : index
    %c0_2 = arith.constant 0 : index
    %1 = vector.load %arg2[%c0_1, %c0_2] : memref<32x16xf32, #tpu.memory_space<vmem>>, vector<32x16xf32>
    %cst = arith.constant dense<0.000000e+00> : vector<8x16xf32>
    %2 = tpu.matmul %0, %1, %cst {dimension_numbers = #tpu.dot_dimension_numbers<[1], [0], [0], [1], [0, 0, 1, 1], [], []>} : vector<8x32xf32>, vector<32x16xf32>, vector<8x16xf32> -> vector<8x16xf32>
    %c0_3 = arith.constant 0 : index
    %c0_4 = arith.constant 0 : index
    %3 = vector.load %arg3[%c0_3, %c0_4] : memref<1x16xf32, #tpu.memory_space<vmem>>, vector<1x16xf32>
    %4 = vector.broadcast %3 : vector<1x16xf32> to vector<8x16xf32>
    %5 = arith.addf %2, %4 : vector<8x16xf32>
    %cst_5 = arith.constant 0.000000e+00 : f32
    %6 = vector.broadcast %cst_5 : f32 to vector<8x16xf32>
    %7 = arith.maximumf %5, %6 : vector<8x16xf32>
    %c0_6 = arith.constant 0 : index
    %c0_7 = arith.constant 0 : index
    %8 = vector.load %arg4[%c0_6, %c0_7] : memref<16x128xf32, #tpu.memory_space<vmem>>, vector<16x128xf32>
    %cst_8 = arith.constant dense<0.000000e+00> : vector<8x128xf32>
    %9 = tpu.matmul %7, %8, %cst_8 {dimension_numbers = #tpu.dot_dimension_numbers<[1], [0], [0], [1], [0, 0, 1, 1], [], []>} : vector<8x16xf32>, vector<16x128xf32>, vector<8x128xf32> -> vector<8x128xf32>
    %c0_9 = arith.constant 0 : index
    %c0_10 = arith.constant 0 : index
    %10 = vector.load %arg5[%c0_9, %c0_10] : memref<1x128xf32, #tpu.memory_space<vmem>>, vector<1x128xf32>
    %11 = vector.broadcast %10 : vector<1x128xf32> to vector<8x128xf32>
    %12 = arith.addf %9, %11 : vector<8x128xf32>
    %13 = tpu.iota {dimensions = array<i32: 1>} : vector<8x128xi32>
    %c8_i32 = arith.constant 8 : i32
    %14 = vector.broadcast %c8_i32 : i32 to vector<8x128xi32>
    %15 = arith.cmpi slt, %13, %14 : vector<8x128xi32>
    %cst_11 = arith.constant 0xFF800000 : f32
    %16 = vector.broadcast %cst_11 : f32 to vector<8x128xf32>
    %17 = arith.select %15, %12, %16 : vector<8x128xi1>, vector<8x128xf32>
    %cst_12 = arith.constant dense<0xFF800000> : vector<8xf32>
    %18 = vector.multi_reduction <maximumf>, %17, %cst_12 [1] : vector<8x128xf32> to vector<8xf32>
    %19 = vector.shape_cast %18 : vector<8xf32> to vector<8x1xf32>
    %20 = vector.broadcast %19 : vector<8x1xf32> to vector<8x128xf32>
    %21 = arith.subf %17, %20 : vector<8x128xf32>
    %22 = math.exp %21 : vector<8x128xf32>
    %cst_13 = arith.constant dense<0.000000e+00> : vector<8xf32>
    %23 = vector.multi_reduction <add>, %22, %cst_13 [1] : vector<8x128xf32> to vector<8xf32>
    %24 = vector.shape_cast %23 : vector<8xf32> to vector<8x1xf32>
    %25 = tpu.reciprocal %24 : vector<8x1xf32> -> vector<8x1xf32>
    %26 = vector.broadcast %25 : vector<8x1xf32> to vector<8x128xf32>
    %27 = arith.mulf %22, %26 : vector<8x128xf32>
    %c0_14 = arith.constant 0 : index
    %c0_15 = arith.constant 0 : index
    %28 = vector.load %arg6[%c0_14, %c0_15] : memref<8x128xf32, #tpu.memory_space<vmem>>, vector<8x128xf32>
    tpu.vector_store %arg6[%c0_14, %c0_15], %27 {strides = array<i32>} : memref<8x128xf32, #tpu.memory_space<vmem>>, vector<8x128xf32>,
    return
  }
  func.func @transform_0(%arg0: i32) -> (i32, i32) {
    %c0_i32 = arith.constant 0 : i32
    %c0_i32_0 = arith.constant 0 : i32
    return %arg0, %c0_i32 : i32, i32
  }
  func.func @transform_1(%arg0: i32) -> (i32, i32) {
    %c0_i32 = arith.constant 0 : i32
    %c0_i32_0 = arith.constant 0 : i32
    %c0_i32_1 = arith.constant 0 : i32
    return %c0_i32, %c0_i32_0 : i32, i32
  }
  func.func @transform_2(%arg0: i32) -> (i32, i32) {
    %c0_i32 = arith.constant 0 : i32
    %c0_i32_0 = arith.constant 0 : i32
    %c0_i32_1 = arith.constant 0 : i32
    return %c0_i32, %c0_i32_0 : i32, i32
  }
  func.func @transform_3(%arg0: i32) -> (i32, i32) {
    %c0_i32 = arith.constant 0 : i32
    %c0_i32_0 = arith.constant 0 : i32
    %c0_i32_1 = arith.constant 0 : i32
    return %c0_i32, %c0_i32_0 : i32, i32
  }
  func.func @transform_4(%arg0: i32) -> (i32, i32) {
    %c0_i32 = arith.constant 0 : i32
    %c0_i32_0 = arith.constant 0 : i32
    %c0_i32_1 = arith.constant 0 : i32
    return %c0_i32, %c0_i32_0 : i32, i32
  }
  func.func @transform_5(%arg0: i32) -> (i32, i32) {
    %c0_i32 = arith.constant 0 : i32
    %c0_i32_0 = arith.constant 0 : i32
    return %arg0, %c0_i32 : i32, i32
  }
}

</mosaic_0001>

<llo_original>
// kernel: tpu_custom_call.1
$region0: #{tpu_custom_call.1}
  #allocation0 [shape = 'u32[]', space=smem, size = 0x4, offset = 0x4, fixed_abs, tag = 'smem constant byte address 0x4 - core index']
  #allocation1 [shape = 'u32[144,128]{1,0:T(1,128)}', space=vmem, size = 0x12000, scoped, tag = 'internal scratch']
  %s0 = inlined_call_operand.vmem [shape: f32[8,32], index: 0, kind: input, shape index: {}]
  %s1 = inlined_call_operand.vmem [shape: f32[32,16], index: 1, kind: input, shape index: {}]
  %s2 = inlined_call_operand.vmem [shape: f32[1,16], index: 2, kind: input, shape index: {}]
  %s3 = inlined_call_operand.vmem [shape: f32[16,128], index: 3, kind: input, shape index: {}]
  %s4 = inlined_call_operand.vmem [shape: f32[1,128], index: 4, kind: input, shape index: {}]
  %s5 = inlined_call_operand.hbm [shape: f32[8,128], index: 5, kind: output, shape index: {}]
  %s6 = sld [smem:[#allocation0]]
  $region30: #{tpu_custom_call.1} parent=0
    _
  %s8 = ssub.s32 1, %s6
  %s9 = scalar_select 0, %s8, %s6
  $region1: #{tpu_custom_call.1} parent=0
    #allocation2 [shape = 'u8[4096]{0}', space=vmem, size = 0x1000, scoped, tag = 'output window, operand 0, single buffered']
    #allocation3 [shape = 's32[1]{0}', space=sflag, size = 0x4, scoped, tag = 'scoped memory for tpu_custom_call.1']
    %10 = vsyncpa [#allocation3], 0
    // Predicated region
    $region2: #{tpu_custom_call.1} parent=1 // pred_check
      _
    $region3: #{tpu_custom_call.1} parent=1 // pred_check_branch
      %12 = sbr.rel (0) target = $region5
    $region4: #{tpu_custom_call.1} parent=1 // pred_region
      _
    $region5: #{tpu_custom_call.1} parent=1 // pred_fallthru
      _
    // Predicated region
    $region6: #{tpu_custom_call.1} parent=1 // pred_check
      _
    $region7: #{tpu_custom_call.1} parent=1 // pred_check_branch
      %14 = sbr.rel (0) target = $region9
    $region8: #{tpu_custom_call.1} parent=1 // pred_region
      _
    $region9: #{tpu_custom_call.1} parent=1 // pred_fallthru
      _
    // Predicated region
    $region10: #{tpu_custom_call.1} parent=1 // pred_check
      _
    $region11: #{tpu_custom_call.1} parent=1 // pred_check_branch
      %16 = sbr.rel (0) target = $region13
    $region12: #{tpu_custom_call.1} parent=1 // pred_region
      _
    $region13: #{tpu_custom_call.1} parent=1 // pred_fallthru
      _
    // Predicated region
    $region14: #{tpu_custom_call.1} parent=1 // pred_check
      _
    $region15: #{tpu_custom_call.1} parent=1 // pred_check_branch
      %18 = sbr.rel (0) target = $region17
    $region16: #{tpu_custom_call.1} parent=1 // pred_region
      _
    $region17: #{tpu_custom_call.1} parent=1 // pred_fallthru
      _
    // Predicated region
    $region18: #{tpu_custom_call.1} parent=1 // pred_check
      _
    $region19: #{tpu_custom_call.1} parent=1 // pred_check_branch
      %20 = sbr.rel (0) target = $region21
    $region20: #{tpu_custom_call.1} parent=1 // pred_region
      _
    $region21: #{tpu_custom_call.1} parent=1 // pred_fallthru
      _
    %v21 = vld [vmem:[%s0] sm:$0xff]
    %v22 = vld [vmem:[%s1] sm:$0xff]
    %v23 = vld [vmem:[%s1 + $0x8] sm:$0xff]
    %v24 = vld [vmem:[%s1 + $0x10] sm:$0xff]
    %v25 = vld [vmem:[%s1 + $0x18] sm:$0xff]
    %v26 = vld [vmem:[%s2] sm:$0x1]
    %v28 = vlaneseq
    %v29 = vshrl.u32 %v28, 7
    %v30 = vsub.s32 0, %v29
    %v31 = vrot.slane %v26, %v30
    %vm33 = vcmask 261120
    %v35 = vsel %vm33, %v21, 0
    %37 = vmatprep.subr.mxu0 0.0
    %38 = vmatpush1.msra.mxu0 0.0
    %39 = vmatprep.subr.mxu0 0.0
    %40 = vmatpush1.msra.mxu0 0.0
    %41 = vmatprep.subr.mxu0 0.0
    %42 = vmatpush1.msra.mxu0 0.0
    %43 = vmatprep.subr.mxu0 0.0
    %44 = vmatpush1.msra.mxu0 0.0
    %45 = vmatprep.subr.mxu0 0.0
    %46 = vmatpush1.msra.mxu0 0.0
    %47 = vmatprep.subr.mxu0 0.0
    %48 = vmatpush1.msra.mxu0 0.0
    %49 = vmatprep.subr.mxu0 0.0
    %50 = vmatpush1.msra.mxu0 0.0
    %51 = vmatprep.subr.mxu0 0.0
    %52 = vmatpush1.msra.mxu0 0.0
    %53 = vmatprep.subr.mxu0 0.0
    %54 = vmatpush1.msra.mxu0 0.0
    %55 = vmatprep.subr.mxu0 0.0
    %56 = vmatpush1.msra.mxu0 0.0
    %57 = vmatprep.subr.mxu0 0.0
    %58 = vmatpush1.msra.mxu0 0.0
    %59 = vmatprep.subr.mxu0 0.0
    %60 = vmatpush1.msra.mxu0 0.0
    %61 = vmatprep.subr.mxu0 0.0
    %62 = vmatpush1.msra.mxu0 %v25
    %63 = vmatprep.subr.mxu0 0.0
    %64 = vmatpush1.msra.mxu0 %v24
    %65 = vmatprep.subr.mxu0 0.0
    %66 = vmatpush1.msra.mxu0 %v23
    %67 = vmatprep.subr.mxu0 0.0
    %68 = vmatpush1.msra.mxu0 %v22
    %69 = vmatprep.subr.mxu0 0.0
    %70 = vmatpush2.msra.mxu0 0.0
    %71 = vmatprep.subr.mxu0 0.0
    %72 = vmatpush2.msra.mxu0 0.0
    %73 = vmatprep.subr.mxu0 0.0
    %74 = vmatpush2.msra.mxu0 0.0
    %75 = vmatprep.subr.mxu0 0.0
    %76 = vmatpush2.msra.mxu0 0.0
    %77 = vmatprep.subr.mxu0 0.0
    %78 = vmatpush2.msra.mxu0 0.0
    %79 = vmatprep.subr.mxu0 0.0
    %80 = vmatpush2.msra.mxu0 0.0
    %81 = vmatprep.subr.mxu0 0.0
    %82 = vmatpush2.msra.mxu0 0.0
    %83 = vmatprep.subr.mxu0 0.0
    %84 = vmatpush2.msra.mxu0 0.0
    %85 = vmatprep.subr.mxu0 0.0
    %86 = vmatpush2.msra.mxu0 0.0
    %87 = vmatprep.subr.mxu0 0.0
    %88 = vmatpush2.msra.mxu0 0.0
    %89 = vmatprep.subr.mxu0 0.0
    %90 = vmatpush2.msra.mxu0 0.0
    %91 = vmatprep.subr.mxu0 0.0
    %92 = vmatpush2.msra.mxu0 0.0
    %93 = vmatprep.subr.mxu0 0.0
    %94 = vmatpush2.msra.mxu0 0.0
    %95 = vmatprep.subr.mxu0 0.0
    %96 = vmatpush2.msra.mxu0 0.0
    %97 = vmatprep.subr.mxu0 0.0
    %98 = vmatpush2.msra.mxu0 0.0
    %99 = vmatprep.subr.mxu0 0.0
    %100 = vmatpush2.msra.mxu0 0.0
    %101 = vmatprep.mubr.f32.mxu0 0.0
    %102 = vmatmul.mubr.f32.gmra.mxu0 %v35
    %v103 = vpop.f32.mrf.mxu0
    %v104 = vadd.f32 %v31, %v103
    %v105 = vpop.f32.mrf.mxu0
    %106 = vdwg.mxu0
    %v107 = vmax.f32 %v104, 0.0
    %v108 = vld [vmem:[%s3] sm:$0xff]
    %v109 = vld [vmem:[%s3 + $0x8] sm:$0xff]
    %v110 = vld [vmem:[%s4] sm:$0x1]
    %v112 = vlaneseq
    %v113 = vshrl.u32 %v112, 7
    %v114 = vsub.s32 0, %v113
    %v115 = vrot.slane %v110, %v114
    %vm117 = vcmask 130048
    %v119 = vsel %vm117, %v107, 0
    %121 = vmatprep.subr.mxu0 0.0
    %122 = vmatpush1.msra.mxu0 0.0
    %123 = vmatprep.subr.mxu0 0.0
    %124 = vmatpush1.msra.mxu0 0.0
    %125 = vmatprep.subr.mxu0 0.0
    %126 = vmatpush1.msra.mxu0 0.0
    %127 = vmatprep.subr.mxu0 0.0
    %128 = vmatpush1.msra.mxu0 0.0
    %129 = vmatprep.subr.mxu0 0.0
    %130 = vmatpush1.msra.mxu0 0.0
    %131 = vmatprep.subr.mxu0 0.0
    %132 = vmatpush1.msra.mxu0 0.0
    %133 = vmatprep.subr.mxu0 0.0
    %134 = vmatpush1.msra.mxu0 0.0
    %135 = vmatprep.subr.mxu0 0.0
    %136 = vmatpush1.msra.mxu0 0.0
    %137 = vmatprep.subr.mxu0 0.0
    %138 = vmatpush1.msra.mxu0 0.0
    %139 = vmatprep.subr.mxu0 0.0
    %140 = vmatpush1.msra.mxu0 0.0
    %141 = vmatprep.subr.mxu0 0.0
    %142 = vmatpush1.msra.mxu0 0.0
    %143 = vmatprep.subr.mxu0 0.0
    %144 = vmatpush1.msra.mxu0 0.0
    %145 = vmatprep.subr.mxu0 0.0
    %146 = vmatpush1.msra.mxu0 0.0
    %147 = vmatprep.subr.mxu0 0.0
    %148 = vmatpush1.msra.mxu0 0.0
    %149 = vmatprep.subr.mxu0 0.0
    %150 = vmatpush1.msra.mxu0 %v109
    %151 = vmatprep.subr.mxu0 0.0
    %152 = vmatpush1.msra.mxu0 %v108
    %153 = vmatprep.subr.mxu0 0.0
    %154 = vmatpush2.msra.mxu0 0.0
    %155 = vmatprep.subr.mxu0 0.0
    %156 = vmatpush2.msra.mxu0 0.0
    %157 = vmatprep.subr.mxu0 0.0
    %158 = vmatpush2.msra.mxu0 0.0
    %159 = vmatprep.subr.mxu0 0.0
    %160 = vmatpush2.msra.mxu0 0.0
    %161 = vmatprep.subr.mxu0 0.0
    %162 = vmatpush2.msra.mxu0 0.0
    %163 = vmatprep.subr.mxu0 0.0
    %164 = vmatpush2.msra.mxu0 0.0
    %165 = vmatprep.subr.mxu0 0.0
    %166 = vmatpush2.msra.mxu0 0.0
    %167 = vmatprep.subr.mxu0 0.0
    %168 = vmatpush2.msra.mxu0 0.0
    %169 = vmatprep.subr.mxu0 0.0
    %170 = vmatpush2.msra.mxu0 0.0
    %171 = vmatprep.subr.mxu0 0.0
    %172 = vmatpush2.msra.mxu0 0.0
    %173 = vmatprep.subr.mxu0 0.0
    %174 = vmatpush2.msra.mxu0 0.0
    %175 = vmatprep.subr.mxu0 0.0
    %176 = vmatpush2.msra.mxu0 0.0
    %177 = vmatprep.subr.mxu0 0.0
    %178 = vmatpush2.msra.mxu0 0.0
    %179 = vmatprep.subr.mxu0 0.0
    %180 = vmatpush2.msra.mxu0 0.0
    %181 = vmatprep.subr.mxu0 0.0
    %182 = vmatpush2.msra.mxu0 0.0
    %183 = vmatprep.subr.mxu0 0.0
    %184 = vmatpush2.msra.mxu0 0.0
    %185 = vmatprep.mubr.f32.mxu0 0.0
    %186 = vmatmul.mubr.f32.gmra.mxu0 %v119
    %v187 = vpop.f32.mrf.mxu0
    %v188 = vadd.f32 %v115, %v187
    %v189 = vpop.f32.mrf.mxu0
    %190 = vdwg.mxu0
    %v191 = vlaneseq
    %v192 = vand.u32 %v191, 127
    %vm193 = vcmp.lt.s32.totalorder %v192, 8
    %v194 = vsel %vm193, %v188, -inf
    %195 = vmax.xlane.f32.xlu0 %v194
    %v196 = vpop.xlane.xlu0 %195
    %v197 = vsub.f32 %v194, %v196
    %v198 = vmul.f32 %v197, 1.442695
    %v199 = vpow.pop %v198
    %200 = vadd.xlane.f32.xlu0 %v199
    %v201 = vpop.xlane.xlu0 %200
    %v202 = vrcp.pop %v201
    %v203 = vmul.f32 %v199, %v202
    %204 = vst [vmem:[#allocation2] sm:$0xff] %v203
    // Predicated region
    $region22: #{tpu_custom_call.1} parent=1 // pred_check
      _
    $region23: #{tpu_custom_call.1} parent=1 // pred_check_branch
      %206 = sbr.rel (0) target = $region25
    $region24: #{tpu_custom_call.1} parent=1 // pred_region
      %s208 = ssub.s32 128, 128
      %209 = vsyncadd [#allocation3], %s208
      %s211 = sshll.u32 [#allocation2], 4
      %s212 = int_to_ptr.vmem [resolvable:$true] %s211
      %214 = dma.vmem_to_hbm [thread:$0]  %s212, 128, %s5, [#allocation3]
    $region25: #{tpu_custom_call.1} parent=1 // pred_fallthru
      _
    // Predicated region
    $region26: #{tpu_custom_call.1} parent=1 // pred_check
      _
    $region27: #{tpu_custom_call.1} parent=1 // pred_check_branch
      %216 = sbr.rel (0) target = $region29
    $region28: #{tpu_custom_call.1} parent=1 // pred_region
      %217 = dma.done [#allocation3], 128
    $region29: #{tpu_custom_call.1} parent=1 // pred_fallthru
      _
    %218 = vsyncpa [#allocation3], 1

</llo_original>
